<compile_context>
chip_gen: v7x
topology: tpu7x:2x2x1
jax: 0.10.0
libtpu: 0.0.40
codegen_flags: <defaults>
</compile_context>

<pallas_src>
import jax
import jax.numpy as jnp
from jax.experimental import pallas as pl
from jax.experimental.pallas import tpu as pltpu

C_IN = 4      # input channels
C_HID = 32    # hidden channels (decoder1..3 output)
C_OUT = 3     # final output channels (RGB)
MAX_L = 8192  # max spatial positions (lane axis) per grid step


def _decoder_kernel(x_ref,
                    w1_ref, b1_ref,
                    w2_ref, b2_ref,
                    w3_ref, b3_ref,
                    w4_ref, b4_ref,
                    o_ref):
    """Fused 4-stage pointwise decoder on a (C, L) block.

    x_ref: (C_IN, L); weights are pre-transposed (C_out, C_in); biases are
    (C_out, 1) columns that broadcast across the lane (spatial) axis.
    """
    h = x_ref[...]

    h = jnp.dot(w1_ref[...], h, preferred_element_type=jnp.float32) + b1_ref[...]
    h = jnp.maximum(h, 0.0)

    h = jnp.dot(w2_ref[...], h, preferred_element_type=jnp.float32) + b2_ref[...]
    h = jnp.maximum(h, 0.0)

    h = jnp.dot(w3_ref[...], h, preferred_element_type=jnp.float32) + b3_ref[...]
    h = jnp.maximum(h, 0.0)

    h = jnp.dot(w4_ref[...], h, preferred_element_type=jnp.float32) + b4_ref[...]

    o_ref[...] = h.astype(o_ref.dtype)


def decoder_forward(x_nchw, params):
    """x_nchw: [N, C_IN, H, W] float32 -> [N, C_OUT, H, W] float32."""
    (w1, b1), (w2, b2), (w3, b3), (w4, b4) = params
    N, C, H, W = x_nchw.shape
    assert C == C_IN
    HW = H * W

    # Lane tile: a multiple of 128, capped at MAX_L; pad spatial dim if needed.
    hw128 = max(128, ((HW + 127) // 128) * 128)
    L = min(MAX_L, hw128)
    hw_pad = ((HW + L - 1) // L) * L

    x3 = x_nchw.reshape(N, C_IN, HW)
    if hw_pad != HW:
        x3 = jnp.pad(x3, ((0, 0), (0, 0), (0, hw_pad - HW)))

    # Host-side: transpose the tiny weights to (C_out, C_in), biases -> (C, 1).
    w1t, w2t, w3t, w4t = (jnp.transpose(w) for w in (w1, w2, w3, w4))
    b1c, b2c, b3c, b4c = (b.reshape(-1, 1) for b in (b1, b2, b3, b4))

    rows = N * hw_pad
    weight_elems = C_IN * C_HID + 2 * C_HID * C_HID + C_HID * C_OUT
    cost = pl.CostEstimate(
        flops=2 * rows * weight_elems,
        transcendentals=0,
        bytes_accessed=rows * (C_IN + C_OUT) * 4 + weight_elems * 4,
    )

    full = lambda n, j: (0, 0)  # weights / biases are tiny: keep fully resident

    out3 = pl.pallas_call(
        _decoder_kernel,
        out_shape=jax.ShapeDtypeStruct((N, C_OUT, hw_pad), jnp.float32),
        grid_spec=pltpu.PrefetchScalarGridSpec(
            num_scalar_prefetch=0,
            grid=(N, hw_pad // L),
            in_specs=[
                pl.BlockSpec((pl.Squeezed(), C_IN, L), lambda n, j: (n, 0, j)),
                pl.BlockSpec((C_HID, C_IN), full), pl.BlockSpec((C_HID, 1), full),
                pl.BlockSpec((C_HID, C_HID), full), pl.BlockSpec((C_HID, 1), full),
                pl.BlockSpec((C_HID, C_HID), full), pl.BlockSpec((C_HID, 1), full),
                pl.BlockSpec((C_OUT, C_HID), full), pl.BlockSpec((C_OUT, 1), full),
            ],
            out_specs=pl.BlockSpec((pl.Squeezed(), C_OUT, L),
                                   lambda n, j: (n, 0, j)),
        ),
        compiler_params=pltpu.CompilerParams(
            dimension_semantics=("parallel", "parallel")),
        cost_estimate=cost,
    )(x3, w1t, b1c, w2t, b2c, w3t, b3c, w4t, b4c)

    out3 = out3[:, :, :HW]
    return out3.reshape(N, C_OUT, H, W)


def decoder_reference(x_nchw, params):
    """Pure-JAX reference of the same forward pass (for verification)."""
    h = x_nchw
    for idx, (w, b) in enumerate(params):
        # 1x1 conv: weight (cin, cout) applied pointwise over NCHW.
        h = jnp.einsum('nchw,co->nohw', h, w) + b.reshape(1, -1, 1, 1)
        if idx < 3:
            h = jnp.maximum(h, 0.0)
    return h


def init_params(key):
    """Deterministic parameter init (Kaiming-ish scaling)."""
    keys = jax.random.split(key, 8)

    def layer(kw, kb, cin, cout):
        w = jax.random.normal(kw, (cin, cout), jnp.float32) * (1.0 / jnp.sqrt(cin))
        b = jax.random.normal(kb, (cout,), jnp.float32) * 0.01
        return w, b

    return (
        layer(keys[0], keys[1], C_IN,  C_HID),
        layer(keys[2], keys[3], C_HID, C_HID),
        layer(keys[4], keys[5], C_HID, C_HID),
        layer(keys[6], keys[7], C_HID, C_OUT),
    )


if __name__ == "__main__":
    key = jax.random.PRNGKey(0)
    k_x, k_p = jax.random.split(key)

    # small shapes: batch=2, channels=4, spatial=16x16
    x = jax.random.normal(k_x, (2, C_IN, 16, 16), jnp.float32)
    params = init_params(k_p)

    out = decoder_forward(x, params)
    out = jax.block_until_ready(out)

    ref = decoder_reference(x, params)
    assert out.shape == (2, C_OUT, 16, 16), out.shape
    assert jnp.allclose(out, ref, atol=1e-4, rtol=1e-4), "mismatch vs reference"

    print("KERNEL_OK")
</pallas_src>

<mosaic_0001>
module attributes {stable_mosaic.version = 11 : i64} {
  func.func @_decoder_kernel(%arg0: i32, %arg1: i32, %arg2: memref<1x4x256xf32, #tpu.memory_space<vmem>>, %arg3: memref<32x4xf32, #tpu.memory_space<vmem>>, %arg4: memref<32x1xf32, #tpu.memory_space<vmem>>, %arg5: memref<32x32xf32, #tpu.memory_space<vmem>>, %arg6: memref<32x1xf32, #tpu.memory_space<vmem>>, %arg7: memref<32x32xf32, #tpu.memory_space<vmem>>, %arg8: memref<32x1xf32, #tpu.memory_space<vmem>>, %arg9: memref<3x32xf32, #tpu.memory_space<vmem>>, %arg10: memref<3x1xf32, #tpu.memory_space<vmem>>, %arg11: memref<1x3x256xf32, #tpu.memory_space<vmem>>) attributes {dimension_semantics = [#tpu.dimension_semantics<parallel>, #tpu.dimension_semantics<parallel>], iteration_bounds = array<i64: 2, 1>, scalar_prefetch = 0 : i64, scratch_operands = 0 : i64, tpu.core_type = #tpu.core_type<tc>, window_params = [{transform_indices = @transform_0, window_bounds = array<i64: 1, 4, 256>}, {pipeline_mode = #tpu.pipeline_mode<synchronous>, transform_indices = @transform_1, window_bounds = array<i64: 32, 4>}, {pipeline_mode = #tpu.pipeline_mode<synchronous>, transform_indices = @transform_2, window_bounds = array<i64: 32, 1>}, {pipeline_mode = #tpu.pipeline_mode<synchronous>, transform_indices = @transform_3, window_bounds = array<i64: 32, 32>}, {pipeline_mode = #tpu.pipeline_mode<synchronous>, transform_indices = @transform_4, window_bounds = array<i64: 32, 1>}, {pipeline_mode = #tpu.pipeline_mode<synchronous>, transform_indices = @transform_5, window_bounds = array<i64: 32, 32>}, {pipeline_mode = #tpu.pipeline_mode<synchronous>, transform_indices = @transform_6, window_bounds = array<i64: 32, 1>}, {pipeline_mode = #tpu.pipeline_mode<synchronous>, transform_indices = @transform_7, window_bounds = array<i64: 3, 32>}, {pipeline_mode = #tpu.pipeline_mode<synchronous>, transform_indices = @transform_8, window_bounds = array<i64: 3, 1>}, {transform_indices = @transform_9, window_bounds = array<i64: 1, 3, 256>}]} {
    %c0 = arith.constant 0 : index
    %c0_0 = arith.constant 0 : index
    %c0_1 = arith.constant 0 : index
    %0 = vector.load %arg2[%c0, %c0_0, %c0_1] : memref<1x4x256xf32, #tpu.memory_space<vmem>>, vector<1x4x256xf32>
    %1 = vector.shape_cast %0 : vector<1x4x256xf32> to vector<4x256xf32>
    %c0_2 = arith.constant 0 : index
    %c0_3 = arith.constant 0 : index
    %2 = vector.load %arg3[%c0_2, %c0_3] : memref<32x4xf32, #tpu.memory_space<vmem>>, vector<32x4xf32>
    %cst = arith.constant dense<0.000000e+00> : vector<32x256xf32>
    %3 = tpu.matmul %2, %1, %cst {dimension_numbers = #tpu.dot_dimension_numbers<[1], [0], [0], [1], [0, 0, 1, 1], [], []>} : vector<32x4xf32>, vector<4x256xf32>, vector<32x256xf32> -> vector<32x256xf32>
    %c0_4 = arith.constant 0 : index
    %c0_5 = arith.constant 0 : index
    %4 = vector.load %arg4[%c0_4, %c0_5] : memref<32x1xf32, #tpu.memory_space<vmem>>, vector<32x1xf32>
    %5 = vector.broadcast %4 : vector<32x1xf32> to vector<32x256xf32>
    %6 = arith.addf %3, %5 : vector<32x256xf32>
    %cst_6 = arith.constant 0.000000e+00 : f32
    %7 = vector.broadcast %cst_6 : f32 to vector<32x256xf32>
    %8 = arith.maximumf %6, %7 : vector<32x256xf32>
    %c0_7 = arith.constant 0 : index
    %c0_8 = arith.constant 0 : index
    %9 = vector.load %arg5[%c0_7, %c0_8] : memref<32x32xf32, #tpu.memory_space<vmem>>, vector<32x32xf32>
    %cst_9 = arith.constant dense<0.000000e+00> : vector<32x256xf32>
    %10 = tpu.matmul %9, %8, %cst_9 {dimension_numbers = #tpu.dot_dimension_numbers<[1], [0], [0], [1], [0, 0, 1, 1], [], []>} : vector<32x32xf32>, vector<32x256xf32>, vector<32x256xf32> -> vector<32x256xf32>
    %c0_10 = arith.constant 0 : index
    %c0_11 = arith.constant 0 : index
    %11 = vector.load %arg6[%c0_10, %c0_11] : memref<32x1xf32, #tpu.memory_space<vmem>>, vector<32x1xf32>
    %12 = vector.broadcast %11 : vector<32x1xf32> to vector<32x256xf32>
    %13 = arith.addf %10, %12 : vector<32x256xf32>
    %cst_12 = arith.constant 0.000000e+00 : f32
    %14 = vector.broadcast %cst_12 : f32 to vector<32x256xf32>
    %15 = arith.maximumf %13, %14 : vector<32x256xf32>
    %c0_13 = arith.constant 0 : index
    %c0_14 = arith.constant 0 : index
    %16 = vector.load %arg7[%c0_13, %c0_14] : memref<32x32xf32, #tpu.memory_space<vmem>>, vector<32x32xf32>
    %cst_15 = arith.constant dense<0.000000e+00> : vector<32x256xf32>
    %17 = tpu.matmul %16, %15, %cst_15 {dimension_numbers = #tpu.dot_dimension_numbers<[1], [0], [0], [1], [0, 0, 1, 1], [], []>} : vector<32x32xf32>, vector<32x256xf32>, vector<32x256xf32> -> vector<32x256xf32>
    %c0_16 = arith.constant 0 : index
    %c0_17 = arith.constant 0 : index
    %18 = vector.load %arg8[%c0_16, %c0_17] : memref<32x1xf32, #tpu.memory_space<vmem>>, vector<32x1xf32>
    %19 = vector.broadcast %18 : vector<32x1xf32> to vector<32x256xf32>
    %20 = arith.addf %17, %19 : vector<32x256xf32>
    %cst_18 = arith.constant 0.000000e+00 : f32
    %21 = vector.broadcast %cst_18 : f32 to vector<32x256xf32>
    %22 = arith.maximumf %20, %21 : vector<32x256xf32>
    %c0_19 = arith.constant 0 : index
    %c0_20 = arith.constant 0 : index
    %23 = vector.load %arg9[%c0_19, %c0_20] : memref<3x32xf32, #tpu.memory_space<vmem>>, vector<3x32xf32>
    %cst_21 = arith.constant dense<0.000000e+00> : vector<3x256xf32>
    %24 = tpu.matmul %23, %22, %cst_21 {dimension_numbers = #tpu.dot_dimension_numbers<[1], [0], [0], [1], [0, 0, 1, 1], [], []>} : vector<3x32xf32>, vector<32x256xf32>, vector<3x256xf32> -> vector<3x256xf32>
    %c0_22 = arith.constant 0 : index
    %c0_23 = arith.constant 0 : index
    %25 = vector.load %arg10[%c0_22, %c0_23] : memref<3x1xf32, #tpu.memory_space<vmem>>, vector<3x1xf32>
    %26 = vector.broadcast %25 : vector<3x1xf32> to vector<3x256xf32>
    %27 = arith.addf %24, %26 : vector<3x256xf32>
    %c0_24 = arith.constant 0 : index
    %c0_25 = arith.constant 0 : index
    %c0_26 = arith.constant 0 : index
    %28 = vector.load %arg11[%c0_24, %c0_25, %c0_26] : memref<1x3x256xf32, #tpu.memory_space<vmem>>, vector<1x3x256xf32>
    %29 = vector.shape_cast %28 : vector<1x3x256xf32> to vector<3x256xf32>
    %30 = vector.shape_cast %27 : vector<3x256xf32> to vector<1x3x256xf32>
    tpu.vector_store %arg11[%c0_24, %c0_25, %c0_26], %30 {strides = array<i32>} : memref<1x3x256xf32, #tpu.memory_space<vmem>>, vector<1x3x256xf32>,
    return
  }
  func.func @transform_0(%arg0: i32, %arg1: i32) -> (i32, i32, i32) {
    %c0_i32 = arith.constant 0 : i32
    %c0_i32_0 = arith.constant 0 : i32
    return %arg0, %c0_i32, %arg1 : i32, i32, i32
  }
  func.func @transform_1(%arg0: i32, %arg1: i32) -> (i32, i32) {
    %c0_i32 = arith.constant 0 : i32
    %c0_i32_0 = arith.constant 0 : i32
    %c0_i32_1 = arith.constant 0 : i32
    return %c0_i32, %c0_i32_0 : i32, i32
  }
  func.func @transform_2(%arg0: i32, %arg1: i32) -> (i32, i32) {
    %c0_i32 = arith.constant 0 : i32
    %c0_i32_0 = arith.constant 0 : i32
    %c0_i32_1 = arith.constant 0 : i32
    return %c0_i32, %c0_i32_0 : i32, i32
  }
  func.func @transform_3(%arg0: i32, %arg1: i32) -> (i32, i32) {
    %c0_i32 = arith.constant 0 : i32
    %c0_i32_0 = arith.constant 0 : i32
    %c0_i32_1 = arith.constant 0 : i32
    return %c0_i32, %c0_i32_0 : i32, i32
  }
  func.func @transform_4(%arg0: i32, %arg1: i32) -> (i32, i32) {
    %c0_i32 = arith.constant 0 : i32
    %c0_i32_0 = arith.constant 0 : i32
    %c0_i32_1 = arith.constant 0 : i32
    return %c0_i32, %c0_i32_0 : i32, i32
  }
  func.func @transform_5(%arg0: i32, %arg1: i32) -> (i32, i32) {
    %c0_i32 = arith.constant 0 : i32
    %c0_i32_0 = arith.constant 0 : i32
    %c0_i32_1 = arith.constant 0 : i32
    return %c0_i32, %c0_i32_0 : i32, i32
  }
  func.func @transform_6(%arg0: i32, %arg1: i32) -> (i32, i32) {
    %c0_i32 = arith.constant 0 : i32
    %c0_i32_0 = arith.constant 0 : i32
    %c0_i32_1 = arith.constant 0 : i32
    return %c0_i32, %c0_i32_0 : i32, i32
  }
  func.func @transform_7(%arg0: i32, %arg1: i32) -> (i32, i32) {
    %c0_i32 = arith.constant 0 : i32
    %c0_i32_0 = arith.constant 0 : i32
    %c0_i32_1 = arith.constant 0 : i32
    return %c0_i32, %c0_i32_0 : i32, i32
  }
  func.func @transform_8(%arg0: i32, %arg1: i32) -> (i32, i32) {
    %c0_i32 = arith.constant 0 : i32
    %c0_i32_0 = arith.constant 0 : i32
    %c0_i32_1 = arith.constant 0 : i32
    return %c0_i32, %c0_i32_0 : i32, i32
  }
  func.func @transform_9(%arg0: i32, %arg1: i32) -> (i32, i32, i32) {
    %c0_i32 = arith.constant 0 : i32
    %c0_i32_0 = arith.constant 0 : i32
    return %arg0, %c0_i32, %arg1 : i32, i32, i32
  }
}

</mosaic_0001>

<llo_original>
// kernel: tpu_custom_call.1
$region0: #{tpu_custom_call.1}
  #allocation0 [shape = 'u32[]', space=smem, size = 0x4, offset = 0x4, fixed_abs, tag = 'smem constant byte address 0x4 - core index']
  #allocation1 [shape = 'u32[144,128]{1,0:T(1,128)}', space=vmem, size = 0x12000, scoped, tag = 'internal scratch']
  %s0 = inlined_call_operand.vmem [shape: f32[2,4,256], index: 0, kind: input, shape index: {}]
  %s1 = inlined_call_operand.vmem [shape: f32[32,4], index: 1, kind: input, shape index: {}]
  %s2 = inlined_call_operand.vmem [shape: f32[32,1], index: 2, kind: input, shape index: {}]
  %s3 = inlined_call_operand.vmem [shape: f32[32,32], index: 3, kind: input, shape index: {}]
  %s4 = inlined_call_operand.vmem [shape: f32[32,1], index: 4, kind: input, shape index: {}]
  %s5 = inlined_call_operand.vmem [shape: f32[32,32], index: 5, kind: input, shape index: {}]
  %s6 = inlined_call_operand.vmem [shape: f32[32,1], index: 6, kind: input, shape index: {}]
  %s7 = inlined_call_operand.vmem [shape: f32[3,32], index: 7, kind: input, shape index: {}]
  %s8 = inlined_call_operand.vmem [shape: f32[3,1], index: 8, kind: input, shape index: {}]
  %s9 = inlined_call_operand.vmem [shape: f32[2,3,256], index: 9, kind: output, shape index: {}]
  %s10 = sld [smem:[#allocation0]]
  $region69: #{tpu_custom_call.1} parent=0
    _
  %s12 = ssub.s32 1, %s10
  %s13 = scalar_select 0, %s12, %s10
  loop: start=0, step=1, limit=4
  $region2: #{tpu_custom_call.1} parent=0 // loop_pre_header
    _
  $region3: #{tpu_custom_call.1} parent=0 // loop_header
    %s15 = sphi 0, %s19
    %p16 = scmp.ge.s32.totalorder %s15, 4
    %s22 = sphi 0, %s34
    %s23 = sphi 0, %s30
    %s24 = sphi 0, %s22
    %s25 = sphi 0, %s23
    %s26 = sphi 0, %s24
    %s27 = sphi 0, %s25
    %s39 = sphi 0, %s41
    %s42 = sphi 0, %s39
    %s43 = sphi 0, %s42
    %s59 = sphi 0, %s43
    %s63 = sphi 0, %s63
    %s65 = sphi 0, %s63
    %s66 = sphi 0, %s65
    %s80 = sphi 0, %s66
    %s84 = sphi 0, %s84
    %s86 = sphi 0, %s84
    %s87 = sphi 0, %s86
    %s101 = sphi 0, %s87
    %s105 = sphi 0, %s105
    %s107 = sphi 0, %s105
    %s108 = sphi 0, %s107
    %s122 = sphi 0, %s108
    %s126 = sphi 0, %s126
    %s128 = sphi 0, %s126
    %s129 = sphi 0, %s128
    %s143 = sphi 0, %s129
    %s147 = sphi 0, %s147
    %s149 = sphi 0, %s147
    %s150 = sphi 0, %s149
    %s164 = sphi 0, %s150
    %s168 = sphi 0, %s168
    %s170 = sphi 0, %s168
    %s171 = sphi 0, %s170
    %s185 = sphi 0, %s171
    %s189 = sphi 0, %s189
    %s191 = sphi 0, %s189
    %s192 = sphi 0, %s191
    %s206 = sphi 0, %s192
    %s210 = sphi 0, %s210
    %s212 = sphi 0, %s210
    %s213 = sphi 0, %s212
    %s227 = sphi 0, %s213
    %s235 = sphi 0, %s237
    %s238 = sphi 0, %s235
    %s239 = sphi 0, %s238
    %s255 = sphi 0, %s239
  $region4: #{tpu_custom_call.1} parent=0 // loop_header_branch
    %18 = sbr.rel (%p16) target = $region8
  $region5: #{tpu_custom_call.1} parent=0 // loop_body
    %s20 = ssub.s32 %s15, 1
    %s21 = ssub.s32 %s15, 2
    %s28 = sadd.s32 1, %s23
    %p29 = scmp.ge.s32.totalorder %s28, 1
    %s30 = scalar_select %p29, 0, %s28
    %s31 = sadd.s32 1, %s22
    %s32 = scalar_select %p29, %s31, %s22
    %p33 = scmp.ge.s32.totalorder %s32, 2
    %s34 = scalar_select %p33, 0, %s32
    %s35 = ssub.s32 %s22, %s34
    %s36 = ssub.s32 %s23, %s30
    %s37 = sor.u32 %s35, %s36
    %p38 = scmp.eq.s32.totalorder %s37, 0
    %s40 = sadd.s32 %s39, 1
    %s41 = scalar_select %p38, %s39, %s40
    %p44 = pneg %p38
    %p45 = scmp.eq.s32.totalorder %s15, 1
    %p46 = por %p44, %p45
    %p47 = scmp.ne.s32.totalorder %s39, %s42
    %p48 = scmp.eq.s32.totalorder %s15, 0
    %p49 = por %p47, %p48
    %p50 = scmp.ne.s32.totalorder %s39, %s42
    %p51 = scmp.eq.s32.totalorder %s20, 1
    %p52 = por %p50, %p51
    %p53 = scmp.ne.s32.totalorder %s42, %s43
    %p54 = scmp.eq.s32.totalorder %s20, 0
    %p55 = por %p53, %p54
    %p56 = scmp.ne.s32.totalorder %s42, %s43
    %p57 = scmp.eq.s32.totalorder %s21, 1
    %p58 = por %p56, %p57
    %p60 = scmp.ne.s32.totalorder %s43, %s59
    %p61 = scmp.eq.s32.totalorder %s21, 0
    %p62 = por %p60, %p61
    %s64 = sadd.s32 %s63, 1
    %p67 = scmp.eq.s32.totalorder %s15, 1
    %p68 = scmp.ne.s32.totalorder %s63, %s65
    %p69 = scmp.eq.s32.totalorder %s15, 0
    %p70 = por %p68, %p69
    %p71 = scmp.ne.s32.totalorder %s63, %s65
    %p72 = scmp.eq.s32.totalorder %s20, 1
    %p73 = por %p71, %p72
    %p74 = scmp.ne.s32.totalorder %s65, %s66
    %p75 = scmp.eq.s32.totalorder %s20, 0
    %p76 = por %p74, %p75
    %p77 = scmp.ne.s32.totalorder %s65, %s66
    %p78 = scmp.eq.s32.totalorder %s21, 1
    %p79 = por %p77, %p78
    %p81 = scmp.ne.s32.totalorder %s66, %s80
    %p82 = scmp.eq.s32.totalorder %s21, 0
    %p83 = por %p81, %p82
    %s85 = sadd.s32 %s84, 1
    %p88 = scmp.eq.s32.totalorder %s15, 1
    %p89 = scmp.ne.s32.totalorder %s84, %s86
    %p90 = scmp.eq.s32.totalorder %s15, 0
    %p91 = por %p89, %p90
    %p92 = scmp.ne.s32.totalorder %s84, %s86
    %p93 = scmp.eq.s32.totalorder %s20, 1
    %p94 = por %p92, %p93
    %p95 = scmp.ne.s32.totalorder %s86, %s87
    %p96 = scmp.eq.s32.totalorder %s20, 0
    %p97 = por %p95, %p96
    %p98 = scmp.ne.s32.totalorder %s86, %s87
    %p99 = scmp.eq.s32.totalorder %s21, 1
    %p100 = por %p98, %p99
    %p102 = scmp.ne.s32.totalorder %s87, %s101
    %p103 = scmp.eq.s32.totalorder %s21, 0
    %p104 = por %p102, %p103
    %s106 = sadd.s32 %s105, 1
    %p109 = scmp.eq.s32.totalorder %s15, 1
    %p110 = scmp.ne.s32.totalorder %s105, %s107
    %p111 = scmp.eq.s32.totalorder %s15, 0
    %p112 = por %p110, %p111
    %p113 = scmp.ne.s32.totalorder %s105, %s107
    %p114 = scmp.eq.s32.totalorder %s20, 1
    %p115 = por %p113, %p114
    %p116 = scmp.ne.s32.totalorder %s107, %s108
    %p117 = scmp.eq.s32.totalorder %s20, 0
    %p118 = por %p116, %p117
    %p119 = scmp.ne.s32.totalorder %s107, %s108
    %p120 = scmp.eq.s32.totalorder %s21, 1
    %p121 = por %p119, %p120
    %p123 = scmp.ne.s32.totalorder %s108, %s122
    %p124 = scmp.eq.s32.totalorder %s21, 0
    %p125 = por %p123, %p124
    %s127 = sadd.s32 %s126, 1
    %p130 = scmp.eq.s32.totalorder %s15, 1
    %p131 = scmp.ne.s32.totalorder %s126, %s128
    %p132 = scmp.eq.s32.totalorder %s15, 0
    %p133 = por %p131, %p132
    %p134 = scmp.ne.s32.totalorder %s126, %s128
    %p135 = scmp.eq.s32.totalorder %s20, 1
    %p136 = por %p134, %p135
    %p137 = scmp.ne.s32.totalorder %s128, %s129
    %p138 = scmp.eq.s32.totalorder %s20, 0
    %p139 = por %p137, %p138
    %p140 = scmp.ne.s32.totalorder %s128, %s129
    %p141 = scmp.eq.s32.totalorder %s21, 1
    %p142 = por %p140, %p141
    %p144 = scmp.ne.s32.totalorder %s129, %s143
    %p145 = scmp.eq.s32.totalorder %s21, 0
    %p146 = por %p144, %p145
    %s148 = sadd.s32 %s147, 1
    %p151 = scmp.eq.s32.totalorder %s15, 1
    %p152 = scmp.ne.s32.totalorder %s147, %s149
    %p153 = scmp.eq.s32.totalorder %s15, 0
    %p154 = por %p152, %p153
    %p155 = scmp.ne.s32.totalorder %s147, %s149
    %p156 = scmp.eq.s32.totalorder %s20, 1
    %p157 = por %p155, %p156
    %p158 = scmp.ne.s32.totalorder %s149, %s150
    %p159 = scmp.eq.s32.totalorder %s20, 0
    %p160 = por %p158, %p159
    %p161 = scmp.ne.s32.totalorder %s149, %s150
    %p162 = scmp.eq.s32.totalorder %s21, 1
    %p163 = por %p161, %p162
    %p165 = scmp.ne.s32.totalorder %s150, %s164
    %p166 = scmp.eq.s32.totalorder %s21, 0
    %p167 = por %p165, %p166
    %s169 = sadd.s32 %s168, 1
    %p172 = scmp.eq.s32.totalorder %s15, 1
    %p173 = scmp.ne.s32.totalorder %s168, %s170
    %p174 = scmp.eq.s32.totalorder %s15, 0
    %p175 = por %p173, %p174
    %p176 = scmp.ne.s32.totalorder %s168, %s170
    %p177 = scmp.eq.s32.totalorder %s20, 1
    %p178 = por %p176, %p177
    %p179 = scmp.ne.s32.totalorder %s170, %s171
    %p180 = scmp.eq.s32.totalorder %s20, 0
    %p181 = por %p179, %p180
    %p182 = scmp.ne.s32.totalorder %s170, %s171
    %p183 = scmp.eq.s32.totalorder %s21, 1
    %p184 = por %p182, %p183
    %p186 = scmp.ne.s32.totalorder %s171, %s185
    %p187 = scmp.eq.s32.totalorder %s21, 0
    %p188 = por %p186, %p187
    %s190 = sadd.s32 %s189, 1
    %p193 = scmp.eq.s32.totalorder %s15, 1
    %p194 = scmp.ne.s32.totalorder %s189, %s191
    %p195 = scmp.eq.s32.totalorder %s15, 0
    %p196 = por %p194, %p195
    %p197 = scmp.ne.s32.totalorder %s189, %s191
    %p198 = scmp.eq.s32.totalorder %s20, 1
    %p199 = por %p197, %p198
    %p200 = scmp.ne.s32.totalorder %s191, %s192
    %p201 = scmp.eq.s32.totalorder %s20, 0
    %p202 = por %p200, %p201
    %p203 = scmp.ne.s32.totalorder %s191, %s192
    %p204 = scmp.eq.s32.totalorder %s21, 1
    %p205 = por %p203, %p204
    %p207 = scmp.ne.s32.totalorder %s192, %s206
    %p208 = scmp.eq.s32.totalorder %s21, 0
    %p209 = por %p207, %p208
    %s211 = sadd.s32 %s210, 1
    %p214 = scmp.eq.s32.totalorder %s15, 1
    %p215 = scmp.ne.s32.totalorder %s210, %s212
    %p216 = scmp.eq.s32.totalorder %s15, 0
    %p217 = por %p215, %p216
    %p218 = scmp.ne.s32.totalorder %s210, %s212
    %p219 = scmp.eq.s32.totalorder %s20, 1
    %p220 = por %p218, %p219
    %p221 = scmp.ne.s32.totalorder %s212, %s213
    %p222 = scmp.eq.s32.totalorder %s20, 0
    %p223 = por %p221, %p222
    %p224 = scmp.ne.s32.totalorder %s212, %s213
    %p225 = scmp.eq.s32.totalorder %s21, 1
    %p226 = por %p224, %p225
    %p228 = scmp.ne.s32.totalorder %s213, %s227
    %p229 = scmp.eq.s32.totalorder %s21, 0
    %p230 = por %p228, %p229
    %s231 = ssub.s32 %s22, %s34
    %s232 = ssub.s32 %s23, %s30
    %s233 = sor.u32 %s231, %s232
    %p234 = scmp.eq.s32.totalorder %s233, 0
    %s236 = sadd.s32 %s235, 1
    %s237 = scalar_select %p234, %s235, %s236
    %p240 = pneg %p234
    %p241 = scmp.eq.s32.totalorder %s15, 1
    %p242 = por %p240, %p241
    %p243 = scmp.ne.s32.totalorder %s235, %s238
    %p244 = scmp.eq.s32.totalorder %s15, 0
    %p245 = por %p243, %p244
    %p246 = scmp.ne.s32.totalorder %s235, %s238
    %p247 = scmp.eq.s32.totalorder %s20, 1
    %p248 = por %p246, %p247
    %p249 = scmp.ne.s32.totalorder %s238, %s239
    %p250 = scmp.eq.s32.totalorder %s20, 0
    %p251 = por %p249, %p250
    %p252 = scmp.ne.s32.totalorder %s238, %s239
    %p253 = scmp.eq.s32.totalorder %s21, 1
    %p254 = por %p252, %p253
    %p256 = scmp.ne.s32.totalorder %s239, %s255
    %p257 = scmp.eq.s32.totalorder %s21, 0
    %p258 = por %p256, %p257
    %p259 = scmp.le.s32.totalorder 1, %s15
    %p260 = scmp.lt.s32.totalorder %s15, 3
    %p261 = pnand %p259, %p260
    %p262 = pneg %p261
    // Predicated region
    $region9: #{tpu_custom_call.1} parent=5 // pred_check
      _
    $region10: #{tpu_custom_call.1} parent=5 // pred_check_branch
      %264 = sbr.rel (%p261) target = $region12
    $region11: #{tpu_custom_call.1} parent=5 // pred_region
      %s265 = ssub.s32 %s15, 1
      // Predicated region
      $region13: #{tpu_custom_call.1} parent=11 // pred_check
        %p266 = pneg %p76
      $region14: #{tpu_custom_call.1} parent=11 // pred_check_branch
        %268 = sbr.rel (%p266) target = $region16
      $region15: #{tpu_custom_call.1} parent=11 // pred_region
        _
      $region16: #{tpu_custom_call.1} parent=11 // pred_fallthru
        _
      // Predicated region
      $region17: #{tpu_custom_call.1} parent=11 // pred_check
        %p269 = pneg %p97
      $region18: #{tpu_custom_call.1} parent=11 // pred_check_branch
        %271 = sbr.rel (%p269) target = $region20
      $region19: #{tpu_custom_call.1} parent=11 // pred_region
        _
      $region20: #{tpu_custom_call.1} parent=11 // pred_fallthru
        _
      // Predicated region
      $region21: #{tpu_custom_call.1} parent=11 // pred_check
        %p272 = pneg %p118
      $region22: #{tpu_custom_call.1} parent=11 // pred_check_branch
        %274 = sbr.rel (%p272) target = $region24
      $region23: #{tpu_custom_call.1} parent=11 // pred_region
        _
      $region24: #{tpu_custom_call.1} parent=11 // pred_fallthru
        _
      // Predicated region
      $region25: #{tpu_custom_call.1} parent=11 // pred_check
        %p275 = pneg %p139
      $region26: #{tpu_custom_call.1} parent=11 // pred_check_branch
        %277 = sbr.rel (%p275) target = $region28
      $region27: #{tpu_custom_call.1} parent=11 // pred_region
        _
      $region28: #{tpu_custom_call.1} parent=11 // pred_fallthru
        _
      // Predicated region
      $region29: #{tpu_custom_call.1} parent=11 // pred_check
        %p278 = pneg %p160
      $region30: #{tpu_custom_call.1} parent=11 // pred_check_branch
        %280 = sbr.rel (%p278) target = $region32
      $region31: #{tpu_custom_call.1} parent=11 // pred_region
        _
      $region32: #{tpu_custom_call.1} parent=11 // pred_fallthru
        _
      // Predicated region
      $region33: #{tpu_custom_call.1} parent=11 // pred_check
        %p281 = pneg %p181
      $region34: #{tpu_custom_call.1} parent=11 // pred_check_branch
        %283 = sbr.rel (%p281) target = $region36
      $region35: #{tpu_custom_call.1} parent=11 // pred_region
        _
      $region36: #{tpu_custom_call.1} parent=11 // pred_fallthru
        _
      // Predicated region
      $region37: #{tpu_custom_call.1} parent=11 // pred_check
        %p284 = pneg %p202
      $region38: #{tpu_custom_call.1} parent=11 // pred_check_branch
        %286 = sbr.rel (%p284) target = $region40
      $region39: #{tpu_custom_call.1} parent=11 // pred_region
        _
      $region40: #{tpu_custom_call.1} parent=11 // pred_fallthru
        _
      // Predicated region
      $region41: #{tpu_custom_call.1} parent=11 // pred_check
        %p287 = pneg %p223
      $region42: #{tpu_custom_call.1} parent=11 // pred_check_branch
        %289 = sbr.rel (%p287) target = $region44
      $region43: #{tpu_custom_call.1} parent=11 // pred_region
        _
      $region44: #{tpu_custom_call.1} parent=11 // pred_fallthru
        _
    $region12: #{tpu_custom_call.1} parent=5 // pred_fallthru
      _
    %p290 = scmp.lt.s32.totalorder %s15, 2
    // Predicated region
    $region45: #{tpu_custom_call.1} parent=5 // pred_check
      %p291 = pneg %p290
    $region46: #{tpu_custom_call.1} parent=5 // pred_check_branch
      %293 = sbr.rel (%p291) target = $region48
    $region47: #{tpu_custom_call.1} parent=5 // pred_region
      // Predicated region
      $region49: #{tpu_custom_call.1} parent=47 // pred_check
        %p294 = pneg %p49
      $region50: #{tpu_custom_call.1} parent=47 // pred_check_branch
        %296 = sbr.rel (%p294) target = $region52
      $region51: #{tpu_custom_call.1} parent=47 // pred_region
        %s297 = smul.u32 2, %s23
        %p298 = scmp.lt.s32.totalorder %s22, 1
        %s299 = scalar_select %p298, %s22, 1
        %p300 = scmp.lt.s32.totalorder %s297, 1
        %s301 = scalar_select %p300, %s297, 1
        %s302 = smul.addr %s299, 2
        %s303 = sadd.s32 %s301, %s302
        %s304 = smul.addr %s303, 4
        %s305 = scalar_lea.vmem %s0, %s304
        %s306 = smul.u32 2, %s23
      $region52: #{tpu_custom_call.1} parent=47 // pred_fallthru
        _
    $region48: #{tpu_custom_call.1} parent=5 // pred_fallthru
      _
    %p307 = scmp.le.s32.totalorder 1, %s15
    %p308 = scmp.lt.s32.totalorder %s15, 3
    %p309 = pnand %p307, %p308
    %p310 = pneg %p309
    // Predicated region
    $region53: #{tpu_custom_call.1} parent=5 // pred_check
      _
    $region54: #{tpu_custom_call.1} parent=5 // pred_check_branch
      %312 = sbr.rel (%p309) target = $region56
    $region55: #{tpu_custom_call.1} parent=5 // pred_region
      %s313 = ssub.s32 %s15, 1
      %s314 = smul.u32 2, %s25
      %p315 = scmp.lt.s32.totalorder %s24, 1
      %s316 = scalar_select %p315, %s24, 1
      %p317 = scmp.lt.s32.totalorder %s314, 1
      %s318 = scalar_select %p317, %s314, 1
      %s319 = smul.addr %s316, 2
      %s320 = sadd.s32 %s318, %s319
      %s321 = smul.addr %s320, 4
      %s322 = scalar_lea.vmem %s0, %s321
      %p323 = pneg %p55
      %p324 = pneg %p52
      %p325 = pneg %p76
      %p326 = pneg %p73
      %p327 = pneg %p97
      %p328 = pneg %p94
      %p329 = pneg %p118
      %p330 = pneg %p115
      %p331 = pneg %p139
      %p332 = pneg %p136
      %p333 = pneg %p160
      %p334 = pneg %p157
      %p335 = pneg %p181
      %p336 = pneg %p178
      %p337 = pneg %p202
      %p338 = pneg %p199
      %p339 = pneg %p223
      %p340 = pneg %p220
      %p341 = pneg %p251
      %p342 = pneg %p248
      %s343 = smul.u32 2, %s25
      %p344 = scmp.lt.s32.totalorder %s24, 1
      %s345 = scalar_select %p344, %s24, 1
      %p346 = scmp.lt.s32.totalorder %s343, 1
      %s347 = scalar_select %p346, %s343, 1
      %s348 = smul.addr %s345, 2
      %s349 = sadd.s32 %s347, %s348
      %s350 = smul.addr %s349, 4
      %s351 = scalar_lea.vmem %s9, %s350
      %s352 = smul.u32 2, %s25
      %p353 = scmp.lt.s32.totalorder %s24, 1
      %s354 = scalar_select %p353, %s24, 1
      %p355 = scmp.lt.s32.totalorder %s352, 1
      %s356 = scalar_select %p355, %s352, 1
      %s357 = smul.addr %s354, 2
      %s358 = sadd.s32 %s356, %s357
      %s359 = smul.addr %s358, 4
      %s360 = scalar_lea.vmem %s0, %s359
      %s361 = smul.u32 2, %s25
      %s362 = smul.u32 2, %s25
      %p363 = scmp.lt.s32.totalorder %s24, 1
      %s364 = scalar_select %p363, %s24, 1
      %p365 = scmp.lt.s32.totalorder %s362, 1
      %s366 = scalar_select %p365, %s362, 1
      %s367 = smul.addr %s364, 2
      %s368 = sadd.s32 %s366, %s367
      %s369 = smul.addr %s368, 4
      %s370 = scalar_lea.vmem %s9, %s369
      %s371 = smul.u32 2, %s25
      %v372 = vld [vmem:[%s360] sm:$0xff]
      %v373 = vld [vmem:[%s1] sm:$0xff]
      %v374 = vld [vmem:[%s1 + $0x8] sm:$0xff]
      %v375 = vld [vmem:[%s1 + $0x10] sm:$0xff]
      %v376 = vld [vmem:[%s1 + $0x18] sm:$0xff]
      %v377 = vld [vmem:[%s2] sm:$0xff]
      %v378 = vld [vmem:[%s2 + $0x8] sm:$0xff]
      %v379 = vld [vmem:[%s2 + $0x10] sm:$0xff]
      %v380 = vld [vmem:[%s2 + $0x18] sm:$0xff]
      %382 = vset.pattern.permute.xlu0 0
      %383 = vperm.xlu0 %382, %v377
      %v384 = vpop.permute.xlu0 %383
      %387 = vset.pattern.permute.xlu0 0
      %388 = vperm.xlu0 %387, %v378
      %v389 = vpop.permute.xlu0 %388
      %392 = vset.pattern.permute.xlu0 0
      %393 = vperm.xlu0 %392, %v379
      %v394 = vpop.permute.xlu0 %393
      %397 = vset.pattern.permute.xlu0 0
      %398 = vperm.xlu0 %397, %v380
      %v399 = vpop.permute.xlu0 %398
      %v402 = vcombine.high %v372, %v372
      %vm403 = vcmask 31744
      %v405 = vsel %vm403, %v373, 0
      %v408 = vsel %vm403, %v374, 0
      %v411 = vsel %vm403, %v375, 0
      %v414 = vsel %vm403, %v376, 0
      %vm416 = vcmask 1043456
      %v417 = vsel %vm416, %v372, 0
      %v419 = vsel %vm416, %v402, 0
      %421 = vmatprep.subr.mxu0 %v419
      %422 = vmatpush1.msra.mxu0 %v417
      %423 = vmatprep.subr.mxu0 0.0
      %424 = vmatpush1.msra.mxu0 0.0
      %425 = vmatprep.subr.mxu0 0.0
      %426 = vmatpush1.msra.mxu0 0.0
      %427 = vmatprep.subr.mxu0 0.0
      %428 = vmatpush1.msra.mxu0 0.0
      %429 = vmatprep.subr.mxu0 0.0
      %430 = vmatpush1.msra.mxu0 0.0
      %431 = vmatprep.subr.mxu0 0.0
      %432 = vmatpush1.msra.mxu0 0.0
      %433 = vmatprep.subr.mxu0 0.0
      %434 = vmatpush1.msra.mxu0 0.0
      %435 = vmatprep.subr.mxu0 0.0
      %436 = vmatpush1.msra.mxu0 0.0
      %437 = vmatprep.subr.mxu0 0.0
      %438 = vmatpush1.msra.mxu0 0.0
      %439 = vmatprep.subr.mxu0 0.0
      %440 = vmatpush1.msra.mxu0 0.0
      %441 = vmatprep.subr.mxu0 0.0
      %442 = vmatpush1.msra.mxu0 0.0
      %443 = vmatprep.subr.mxu0 0.0
      %444 = vmatpush1.msra.mxu0 0.0
      %445 = vmatprep.subr.mxu0 0.0
      %446 = vmatpush1.msra.mxu0 0.0
      %447 = vmatprep.subr.mxu0 0.0
      %448 = vmatpush1.msra.mxu0 0.0
      %449 = vmatprep.subr.mxu0 0.0
      %450 = vmatpush1.msra.mxu0 0.0
      %451 = vmatprep.subr.mxu0 0.0
      %452 = vmatpush1.msra.mxu0 0.0
      %453 = vmatprep.subr.mxu0 0.0
      %454 = vmatpush1.msra.mxu0 0.0
      %455 = vmatprep.subr.mxu0 0.0
      %456 = vmatpush1.msra.mxu0 0.0
      %457 = vmatprep.subr.mxu0 0.0
      %458 = vmatpush1.msra.mxu0 0.0
      %459 = vmatprep.subr.mxu0 0.0
      %460 = vmatpush1.msra.mxu0 0.0
      %461 = vmatprep.subr.mxu0 0.0
      %462 = vmatpush1.msra.mxu0 0.0
      %463 = vmatprep.subr.mxu0 0.0
      %464 = vmatpush1.msra.mxu0 0.0
      %465 = vmatprep.subr.mxu0 0.0
      %466 = vmatpush1.msra.mxu0 0.0
      %467 = vmatprep.subr.mxu0 0.0
      %468 = vmatpush1.msra.mxu0 0.0
      %469 = vmatprep.subr.mxu0 0.0
      %470 = vmatpush1.msra.mxu0 0.0
      %471 = vmatprep.subr.mxu0 0.0
      %472 = vmatpush1.msra.mxu0 0.0
      %473 = vmatprep.subr.mxu0 0.0
      %474 = vmatpush1.msra.mxu0 0.0
      %475 = vmatprep.subr.mxu0 0.0
      %476 = vmatpush1.msra.mxu0 0.0
      %477 = vmatprep.subr.mxu0 0.0
      %478 = vmatpush1.msra.mxu0 0.0
      %479 = vmatprep.subr.mxu0 0.0
      %480 = vmatpush1.msra.mxu0 0.0
      %481 = vmatprep.subr.mxu0 0.0
      %482 = vmatpush1.msra.mxu0 0.0
      %483 = vmatprep.subr.mxu0 0.0
      %484 = vmatpush1.msra.mxu0 0.0
      %485 = vmatprep.mubr.f32.mxu0 0.0
      %486 = vmatmul.mubr.f32.gmra.mrb[0].mxu0 %v405
      %v487 = vpop.f32.mrb[0].mxu0
      %v488 = vadd.f32 %v384, %v487
      %v489 = vpop.f32.mrb[0].mxu0
      %v490 = vadd.f32 %v384, %v489
      %491 = vmatprep.mubr.f32.mxu0 0.0
      %492 = vmatmul.mubr.f32.gmra.mrb[0].mxu0 %v408
      %v493 = vpop.f32.mrb[0].mxu0
      %v494 = vadd.f32 %v389, %v493
      %v495 = vpop.f32.mrb[0].mxu0
      %v496 = vadd.f32 %v389, %v495
      %497 = vmatprep.mubr.f32.mxu0 0.0
      %498 = vmatmul.mubr.f32.gmra.mrb[0].mxu0 %v411
      %v499 = vpop.f32.mrb[0].mxu0
      %v500 = vadd.f32 %v394, %v499
      %v501 = vpop.f32.mrb[0].mxu0
      %v502 = vadd.f32 %v394, %v501
      %503 = vmatprep.mubr.f32.mxu0 0.0
      %504 = vmatmul.mubr.f32.gmra.mrb[0].mxu0 %v414
      %v505 = vpop.f32.mrb[0].mxu0
      %v506 = vadd.f32 %v399, %v505
      %v507 = vpop.f32.mrb[0].mxu0
      %v508 = vadd.f32 %v399, %v507
      %509 = vdwg.mxu0
      %v510 = vmax.f32 %v488, 0.0
      %v511 = vmax.f32 %v490, 0.0
      %v512 = vmax.f32 %v494, 0.0
      %v513 = vmax.f32 %v496, 0.0
      %v514 = vmax.f32 %v500, 0.0
      %v515 = vmax.f32 %v502, 0.0
      %v516 = vmax.f32 %v506, 0.0
      %v517 = vmax.f32 %v508, 0.0
      %v518 = vld [vmem:[%s3] sm:$0xff]
      %v519 = vld [vmem:[%s3 + $0x8] sm:$0xff]
      %v520 = vld [vmem:[%s3 + $0x10] sm:$0xff]
      %v521 = vld [vmem:[%s3 + $0x18] sm:$0xff]
      %v522 = vld [vmem:[%s4] sm:$0xff]
      %v523 = vld [vmem:[%s4 + $0x8] sm:$0xff]
      %v524 = vld [vmem:[%s4 + $0x10] sm:$0xff]
      %v525 = vld [vmem:[%s4 + $0x18] sm:$0xff]
      %527 = vset.pattern.permute.xlu0 0
      %528 = vperm.xlu0 %527, %v522
      %v529 = vpop.permute.xlu0 %528
      %532 = vset.pattern.permute.xlu0 0
      %533 = vperm.xlu0 %532, %v523
      %v534 = vpop.permute.xlu0 %533
      %537 = vset.pattern.permute.xlu0 0
      %538 = vperm.xlu0 %537, %v524
      %v539 = vpop.permute.xlu0 %538
      %542 = vset.pattern.permute.xlu0 0
      %543 = vperm.xlu0 %542, %v525
      %v544 = vpop.permute.xlu0 %543
      %vm546 = vcmask 261120
      %v548 = vsel %vm546, %v518, 0
      %v551 = vsel %vm546, %v519, 0
      %v554 = vsel %vm546, %v520, 0
      %v557 = vsel %vm546, %v521, 0
      %559 = vmatprep.subr.mxu0 %v511
      %560 = vmatpush1.msra.mxu0 %v510
      %561 = vmatprep.subr.mxu0 %v513
      %562 = vmatpush1.msra.mxu0 %v512
      %563 = vmatprep.subr.mxu0 %v515
      %564 = vmatpush1.msra.mxu0 %v514
      %565 = vmatprep.subr.mxu0 %v517
      %566 = vmatpush1.msra.mxu0 %v516
      %567 = vmatprep.subr.mxu0 0.0
      %568 = vmatpush1.msra.mxu0 0.0
      %569 = vmatprep.subr.mxu0 0.0
      %570 = vmatpush1.msra.mxu0 0.0
      %571 = vmatprep.subr.mxu0 0.0
      %572 = vmatpush1.msra.mxu0 0.0
      %573 = vmatprep.subr.mxu0 0.0
      %574 = vmatpush1.msra.mxu0 0.0
      %575 = vmatprep.subr.mxu0 0.0
      %576 = vmatpush1.msra.mxu0 0.0
      %577 = vmatprep.subr.mxu0 0.0
      %578 = vmatpush1.msra.mxu0 0.0
      %579 = vmatprep.subr.mxu0 0.0
      %580 = vmatpush1.msra.mxu0 0.0
      %581 = vmatprep.subr.mxu0 0.0
      %582 = vmatpush1.msra.mxu0 0.0
      %583 = vmatprep.subr.mxu0 0.0
      %584 = vmatpush1.msra.mxu0 0.0
      %585 = vmatprep.subr.mxu0 0.0
      %586 = vmatpush1.msra.mxu0 0.0
      %587 = vmatprep.subr.mxu0 0.0
      %588 = vmatpush1.msra.mxu0 0.0
      %589 = vmatprep.subr.mxu0 0.0
      %590 = vmatpush1.msra.mxu0 0.0
      %591 = vmatprep.subr.mxu0 0.0
      %592 = vmatpush1.msra.mxu0 0.0
      %593 = vmatprep.subr.mxu0 0.0
      %594 = vmatpush1.msra.mxu0 0.0
      %595 = vmatprep.subr.mxu0 0.0
      %596 = vmatpush1.msra.mxu0 0.0
      %597 = vmatprep.subr.mxu0 0.0
      %598 = vmatpush1.msra.mxu0 0.0
      %599 = vmatprep.subr.mxu0 0.0
      %600 = vmatpush1.msra.mxu0 0.0
      %601 = vmatprep.subr.mxu0 0.0
      %602 = vmatpush1.msra.mxu0 0.0
      %603 = vmatprep.subr.mxu0 0.0
      %604 = vmatpush1.msra.mxu0 0.0
      %605 = vmatprep.subr.mxu0 0.0
      %606 = vmatpush1.msra.mxu0 0.0
      %607 = vmatprep.subr.mxu0 0.0
      %608 = vmatpush1.msra.mxu0 0.0
      %609 = vmatprep.subr.mxu0 0.0
      %610 = vmatpush1.msra.mxu0 0.0
      %611 = vmatprep.subr.mxu0 0.0
      %612 = vmatpush1.msra.mxu0 0.0
      %613 = vmatprep.subr.mxu0 0.0
      %614 = vmatpush1.msra.mxu0 0.0
      %615 = vmatprep.subr.mxu0 0.0
      %616 = vmatpush1.msra.mxu0 0.0
      %617 = vmatprep.subr.mxu0 0.0
      %618 = vmatpush1.msra.mxu0 0.0
      %619 = vmatprep.subr.mxu0 0.0
      %620 = vmatpush1.msra.mxu0 0.0
      %621 = vmatprep.subr.mxu0 0.0
      %622 = vmatpush1.msra.mxu0 0.0
      %623 = vmatprep.mubr.f32.mxu0 0.0
      %624 = vmatmul.mubr.f32.gmra.mrb[0].mxu0 %v548
      %v625 = vpop.f32.mrb[0].mxu0
      %v626 = vadd.f32 %v529, %v625
      %v627 = vpop.f32.mrb[0].mxu0
      %v628 = vadd.f32 %v529, %v627
      %629 = vmatprep.mubr.f32.mxu0 0.0
      %630 = vmatmul.mubr.f32.gmra.mrb[0].mxu0 %v551
      %v631 = vpop.f32.mrb[0].mxu0
      %v632 = vadd.f32 %v534, %v631
      %v633 = vpop.f32.mrb[0].mxu0
      %v634 = vadd.f32 %v534, %v633
      %635 = vmatprep.mubr.f32.mxu0 0.0
      %636 = vmatmul.mubr.f32.gmra.mrb[0].mxu0 %v554
      %v637 = vpop.f32.mrb[0].mxu0
      %v638 = vadd.f32 %v539, %v637
      %v639 = vpop.f32.mrb[0].mxu0
      %v640 = vadd.f32 %v539, %v639
      %641 = vmatprep.mubr.f32.mxu0 0.0
      %642 = vmatmul.mubr.f32.gmra.mrb[0].mxu0 %v557
      %v643 = vpop.f32.mrb[0].mxu0
      %v644 = vadd.f32 %v544, %v643
      %v645 = vpop.f32.mrb[0].mxu0
      %v646 = vadd.f32 %v544, %v645
      %647 = vdwg.mxu0
      %v648 = vmax.f32 %v626, 0.0
      %v649 = vmax.f32 %v628, 0.0
      %v650 = vmax.f32 %v632, 0.0
      %v651 = vmax.f32 %v634, 0.0
      %v652 = vmax.f32 %v638, 0.0
      %v653 = vmax.f32 %v640, 0.0
      %v654 = vmax.f32 %v644, 0.0
      %v655 = vmax.f32 %v646, 0.0
      %v656 = vld [vmem:[%s5] sm:$0xff]
      %v657 = vld [vmem:[%s5 + $0x8] sm:$0xff]
      %v658 = vld [vmem:[%s5 + $0x10] sm:$0xff]
      %v659 = vld [vmem:[%s5 + $0x18] sm:$0xff]
      %v660 = vld [vmem:[%s6] sm:$0xff]
      %v661 = vld [vmem:[%s6 + $0x8] sm:$0xff]
      %v662 = vld [vmem:[%s6 + $0x10] sm:$0xff]
      %v663 = vld [vmem:[%s6 + $0x18] sm:$0xff]
      %665 = vset.pattern.permute.xlu0 0
      %666 = vperm.xlu0 %665, %v660
      %v667 = vpop.permute.xlu0 %666
      %670 = vset.pattern.permute.xlu0 0
      %671 = vperm.xlu0 %670, %v661
      %v672 = vpop.permute.xlu0 %671
      %675 = vset.pattern.permute.xlu0 0
      %676 = vperm.xlu0 %675, %v662
      %v677 = vpop.permute.xlu0 %676
      %680 = vset.pattern.permute.xlu0 0
      %681 = vperm.xlu0 %680, %v663
      %v682 = vpop.permute.xlu0 %681
      %v685 = vsel %vm546, %v656, 0
      %v688 = vsel %vm546, %v657, 0
      %v691 = vsel %vm546, %v658, 0
      %v694 = vsel %vm546, %v659, 0
      %696 = vmatprep.subr.mxu0 %v649
      %697 = vmatpush1.msra.mxu0 %v648
      %698 = vmatprep.subr.mxu0 %v651
      %699 = vmatpush1.msra.mxu0 %v650
      %700 = vmatprep.subr.mxu0 %v653
      %701 = vmatpush1.msra.mxu0 %v652
      %702 = vmatprep.subr.mxu0 %v655
      %703 = vmatpush1.msra.mxu0 %v654
      %704 = vmatprep.subr.mxu0 0.0
      %705 = vmatpush1.msra.mxu0 0.0
      %706 = vmatprep.subr.mxu0 0.0
      %707 = vmatpush1.msra.mxu0 0.0
      %708 = vmatprep.subr.mxu0 0.0
      %709 = vmatpush1.msra.mxu0 0.0
      %710 = vmatprep.subr.mxu0 0.0
      %711 = vmatpush1.msra.mxu0 0.0
      %712 = vmatprep.subr.mxu0 0.0
      %713 = vmatpush1.msra.mxu0 0.0
      %714 = vmatprep.subr.mxu0 0.0
      %715 = vmatpush1.msra.mxu0 0.0
      %716 = vmatprep.subr.mxu0 0.0
      %717 = vmatpush1.msra.mxu0 0.0
      %718 = vmatprep.subr.mxu0 0.0
      %719 = vmatpush1.msra.mxu0 0.0
      %720 = vmatprep.subr.mxu0 0.0
      %721 = vmatpush1.msra.mxu0 0.0
      %722 = vmatprep.subr.mxu0 0.0
      %723 = vmatpush1.msra.mxu0 0.0
      %724 = vmatprep.subr.mxu0 0.0
      %725 = vmatpush1.msra.mxu0 0.0
      %726 = vmatprep.subr.mxu0 0.0
      %727 = vmatpush1.msra.mxu0 0.0
      %728 = vmatprep.subr.mxu0 0.0
      %729 = vmatpush1.msra.mxu0 0.0
      %730 = vmatprep.subr.mxu0 0.0
      %731 = vmatpush1.msra.mxu0 0.0
      %732 = vmatprep.subr.mxu0 0.0
      %733 = vmatpush1.msra.mxu0 0.0
      %734 = vmatprep.subr.mxu0 0.0
      %735 = vmatpush1.msra.mxu0 0.0
      %736 = vmatprep.subr.mxu0 0.0
      %737 = vmatpush1.msra.mxu0 0.0
      %738 = vmatprep.subr.mxu0 0.0
      %739 = vmatpush1.msra.mxu0 0.0
      %740 = vmatprep.subr.mxu0 0.0
      %741 = vmatpush1.msra.mxu0 0.0
      %742 = vmatprep.subr.mxu0 0.0
      %743 = vmatpush1.msra.mxu0 0.0
      %744 = vmatprep.subr.mxu0 0.0
      %745 = vmatpush1.msra.mxu0 0.0
      %746 = vmatprep.subr.mxu0 0.0
      %747 = vmatpush1.msra.mxu0 0.0
      %748 = vmatprep.subr.mxu0 0.0
      %749 = vmatpush1.msra.mxu0 0.0
      %750 = vmatprep.subr.mxu0 0.0
      %751 = vmatpush1.msra.mxu0 0.0
      %752 = vmatprep.subr.mxu0 0.0
      %753 = vmatpush1.msra.mxu0 0.0
      %754 = vmatprep.subr.mxu0 0.0
      %755 = vmatpush1.msra.mxu0 0.0
      %756 = vmatprep.subr.mxu0 0.0
      %757 = vmatpush1.msra.mxu0 0.0
      %758 = vmatprep.subr.mxu0 0.0
      %759 = vmatpush1.msra.mxu0 0.0
      %760 = vmatprep.mubr.f32.mxu0 0.0
      %761 = vmatmul.mubr.f32.gmra.mrb[0].mxu0 %v685
      %v762 = vpop.f32.mrb[0].mxu0
      %v763 = vadd.f32 %v667, %v762
      %v764 = vpop.f32.mrb[0].mxu0
      %v765 = vadd.f32 %v667, %v764
      %766 = vmatprep.mubr.f32.mxu0 0.0
      %767 = vmatmul.mubr.f32.gmra.mrb[0].mxu0 %v688
      %v768 = vpop.f32.mrb[0].mxu0
      %v769 = vadd.f32 %v672, %v768
      %v770 = vpop.f32.mrb[0].mxu0
      %v771 = vadd.f32 %v672, %v770
      %772 = vmatprep.mubr.f32.mxu0 0.0
      %773 = vmatmul.mubr.f32.gmra.mrb[0].mxu0 %v691
      %v774 = vpop.f32.mrb[0].mxu0
      %v775 = vadd.f32 %v677, %v774
      %v776 = vpop.f32.mrb[0].mxu0
      %v777 = vadd.f32 %v677, %v776
      %778 = vmatprep.mubr.f32.mxu0 0.0
      %779 = vmatmul.mubr.f32.gmra.mrb[0].mxu0 %v694
      %v780 = vpop.f32.mrb[0].mxu0
      %v781 = vadd.f32 %v682, %v780
      %v782 = vpop.f32.mrb[0].mxu0
      %v783 = vadd.f32 %v682, %v782
      %784 = vdwg.mxu0
      %v785 = vmax.f32 %v763, 0.0
      %v786 = vmax.f32 %v765, 0.0
      %v787 = vmax.f32 %v769, 0.0
      %v788 = vmax.f32 %v771, 0.0
      %v789 = vmax.f32 %v775, 0.0
      %v790 = vmax.f32 %v777, 0.0
      %v791 = vmax.f32 %v781, 0.0
      %v792 = vmax.f32 %v783, 0.0
      %v793 = vld [vmem:[%s7] sm:$0x7]
      %v794 = vld [vmem:[%s8] sm:$0x7]
      %796 = vset.pattern.permute.xlu0 0
      %797 = vperm.xlu0 %796, %v794
      %v798 = vpop.permute.xlu0 %797
      %v801 = vsel %vm546, %v793, 0
      %803 = vmatprep.subr.mxu0 %v786
      %804 = vmatpush1.msra.mxu0 %v785
      %805 = vmatprep.subr.mxu0 %v788
      %806 = vmatpush1.msra.mxu0 %v787
      %807 = vmatprep.subr.mxu0 %v790
      %808 = vmatpush1.msra.mxu0 %v789
      %809 = vmatprep.subr.mxu0 %v792
      %810 = vmatpush1.msra.mxu0 %v791
      %811 = vmatprep.subr.mxu0 0.0
      %812 = vmatpush1.msra.mxu0 0.0
      %813 = vmatprep.subr.mxu0 0.0
      %814 = vmatpush1.msra.mxu0 0.0
      %815 = vmatprep.subr.mxu0 0.0
      %816 = vmatpush1.msra.mxu0 0.0
      %817 = vmatprep.subr.mxu0 0.0
      %818 = vmatpush1.msra.mxu0 0.0
      %819 = vmatprep.subr.mxu0 0.0
      %820 = vmatpush1.msra.mxu0 0.0
      %821 = vmatprep.subr.mxu0 0.0
      %822 = vmatpush1.msra.mxu0 0.0
      %823 = vmatprep.subr.mxu0 0.0
      %824 = vmatpush1.msra.mxu0 0.0
      %825 = vmatprep.subr.mxu0 0.0
      %826 = vmatpush1.msra.mxu0 0.0
      %827 = vmatprep.subr.mxu0 0.0
      %828 = vmatpush1.msra.mxu0 0.0
      %829 = vmatprep.subr.mxu0 0.0
      %830 = vmatpush1.msra.mxu0 0.0
      %831 = vmatprep.subr.mxu0 0.0
      %832 = vmatpush1.msra.mxu0 0.0
      %833 = vmatprep.subr.mxu0 0.0
      %834 = vmatpush1.msra.mxu0 0.0
      %835 = vmatprep.subr.mxu0 0.0
      %836 = vmatpush1.msra.mxu0 0.0
      %837 = vmatprep.subr.mxu0 0.0
      %838 = vmatpush1.msra.mxu0 0.0
      %839 = vmatprep.subr.mxu0 0.0
      %840 = vmatpush1.msra.mxu0 0.0
      %841 = vmatprep.subr.mxu0 0.0
      %842 = vmatpush1.msra.mxu0 0.0
      %843 = vmatprep.subr.mxu0 0.0
      %844 = vmatpush1.msra.mxu0 0.0
      %845 = vmatprep.subr.mxu0 0.0
      %846 = vmatpush1.msra.mxu0 0.0
      %847 = vmatprep.subr.mxu0 0.0
      %848 = vmatpush1.msra.mxu0 0.0
      %849 = vmatprep.subr.mxu0 0.0
      %850 = vmatpush1.msra.mxu0 0.0
      %851 = vmatprep.subr.mxu0 0.0
      %852 = vmatpush1.msra.mxu0 0.0
      %853 = vmatprep.subr.mxu0 0.0
      %854 = vmatpush1.msra.mxu0 0.0
      %855 = vmatprep.subr.mxu0 0.0
      %856 = vmatpush1.msra.mxu0 0.0
      %857 = vmatprep.subr.mxu0 0.0
      %858 = vmatpush1.msra.mxu0 0.0
      %859 = vmatprep.subr.mxu0 0.0
      %860 = vmatpush1.msra.mxu0 0.0
      %861 = vmatprep.subr.mxu0 0.0
      %862 = vmatpush1.msra.mxu0 0.0
      %863 = vmatprep.subr.mxu0 0.0
      %864 = vmatpush1.msra.mxu0 0.0
      %865 = vmatprep.subr.mxu0 0.0
      %866 = vmatpush1.msra.mxu0 0.0
      %867 = vmatprep.mubr.f32.mxu0 0.0
      %868 = vmatmul.mubr.f32.gmra.mrb[0].mxu0 %v801
      %v869 = vpop.f32.mrb[0].mxu0
      %v870 = vadd.f32 %v798, %v869
      %v871 = vpop.f32.mrb[0].mxu0
      %v872 = vadd.f32 %v798, %v871
      %873 = vdwg.mxu0
      %v876 = vcombine.low %v870, %v872
      %878 = vst [vmem:[%s370] sm:$0x77] %v876
      %s879 = smul.u32 2, %s25
      %p880 = scmp.lt.s32.totalorder %s24, 1
      %s881 = scalar_select %p880, %s24, 1
      %p882 = scmp.lt.s32.totalorder %s879, 1
      %s883 = scalar_select %p882, %s879, 1
      %s884 = smul.addr %s881, 2
      %s885 = sadd.s32 %s883, %s884
      %s886 = smul.addr %s885, 4
      %s887 = scalar_lea.vmem %s9, %s886
      // Predicated region
      $region57: #{tpu_custom_call.1} parent=55 // pred_check
        %p888 = pneg %p248
      $region58: #{tpu_custom_call.1} parent=55 // pred_check_branch
        %890 = sbr.rel (%p888) target = $region60
      $region59: #{tpu_custom_call.1} parent=55 // pred_region
        %s891 = smul.u32 2, %s25
      $region60: #{tpu_custom_call.1} parent=55 // pred_fallthru
        _
    $region56: #{tpu_custom_call.1} parent=5 // pred_fallthru
      _
    %p892 = scmp.le.s32.totalorder 2, %s15
    // Predicated region
    $region61: #{tpu_custom_call.1} parent=5 // pred_check
      %p893 = pneg %p892
    $region62: #{tpu_custom_call.1} parent=5 // pred_check_branch
      %895 = sbr.rel (%p893) target = $region64
    $region63: #{tpu_custom_call.1} parent=5 // pred_region
      %s896 = ssub.s32 %s15, 2
      // Predicated region
      $region65: #{tpu_custom_call.1} parent=63 // pred_check
        %p897 = pneg %p254
      $region66: #{tpu_custom_call.1} parent=63 // pred_check_branch
        %899 = sbr.rel (%p897) target = $region68
      $region67: #{tpu_custom_call.1} parent=63 // pred_region
        %s900 = smul.u32 2, %s27
        %p901 = scmp.lt.s32.totalorder %s26, 1
        %s902 = scalar_select %p901, %s26, 1
        %p903 = scmp.lt.s32.totalorder %s900, 1
        %s904 = scalar_select %p903, %s900, 1
        %s905 = smul.addr %s902, 2
        %s906 = sadd.s32 %s904, %s905
        %s907 = smul.addr %s906, 4
        %s908 = scalar_lea.vmem %s9, %s907
      $region68: #{tpu_custom_call.1} parent=63 // pred_fallthru
        _
    $region64: #{tpu_custom_call.1} parent=5 // pred_fallthru
      _
  $region6: #{tpu_custom_call.1} parent=0 // loop_footer
    %s19 = sadd.s32 1, %s15
  $region7: #{tpu_custom_call.1} parent=0 // loop_footer_branch
    %14 = sbr.rel target = $region3
  $region8: #{tpu_custom_call.1} parent=0 // loop_exit
    _

</llo_original>
